<compile_context>
chip_gen: v5e
topology: v5e:2x2
jax: 0.10.0
libtpu: 0.0.40
codegen_flags: <defaults>
</compile_context>

<pallas_src>
import functools
import math

import jax
import jax.numpy as jnp
from jax.experimental import pallas as pl
from jax.experimental.pallas import tpu as pltpu

_LANES = 128


def _round_down(x, m):
    return (x // m) * m


def _sublane_multiple(dtype):
    # Second-to-last block dim must be a multiple of 8 (4-byte), 16 (2-byte),
    # 32 (1-byte) unless it equals the full array dim.
    return max(8, 32 // jnp.dtype(dtype).itemsize)


def _tpu_config():
    """Returns (target_block_bytes_per_input, n_outer_max, vmem_limit_bytes,
    use_core_parallel) based on the TPU generation."""
    try:
        kind = jax.devices()[0].device_kind.lower()
    except Exception:
        kind = ""
    if "v7" in kind or "7x" in kind:
        # 2 TCs/chip, 64 MiB VMEM/TC, ~3.2 TB/s: big blocks + core split.
        return 6 << 20, 2, 48 << 20, True
    if "v6" in kind:
        # 1 TC, 128 MiB VMEM, ~1.4 TB/s.
        return 4 << 20, 1, 64 << 20, False
    # v5e and unknown: modest blocks, stay well inside physical VMEM.
    return 2 << 20, 1, 32 << 20, False


def _accuracy_kernel(pred_ref, gt_ref, out_ref, acc_ref, *, tile_rows, rows,
                     n_inner, n_full_tiles, mode, logit_thr):
    i = pl.program_id(1)

    @pl.when(i == 0)
    def _init():
        acc_ref[...] = jnp.zeros_like(acc_ref)

    if mode == "logit":
        # sigmoid(x) > t  <=>  x > log(t / (1 - t))  for 0 < t < 1.
        x = pred_ref[...].astype(jnp.float32)
        pred_pos = x > jnp.float32(logit_thr)
    elif mode == "all_true":
        # threshold <= 0: sigmoid(x) > threshold is (essentially) always true.
        pred_pos = jnp.ones((tile_rows, _LANES), dtype=jnp.bool_)
    else:  # "all_false": threshold >= 1
        pred_pos = jnp.zeros((tile_rows, _LANES), dtype=jnp.bool_)

    g = gt_ref[...].astype(jnp.float32)
    # Exact PyTorch semantics: binarized prediction compared with gt by float
    # equality (non-binary gt values never match).
    matched = (pred_pos.astype(jnp.float32) == g).astype(jnp.int32)

    # Logical (unclamped) tile index along the row axis.
    t = pl.program_id(0) * n_inner + i

    @pl.when(t < n_full_tiles)
    def _full_tile():
        # Common path: tile fully inside the array -> no mask, pure VPU adds.
        acc_ref[...] += matched.reshape(tile_rows // 8, 8, _LANES).sum(axis=0)

    @pl.when(t >= n_full_tiles)
    def _edge_tile():
        # Partial last tile or clamped duplicate tile of an uneven core split:
        # mask rows beyond the real array (duplicates mask to all-zero).
        row_ids = (t * tile_rows
                   + jax.lax.broadcasted_iota(jnp.int32, (tile_rows, _LANES), 0))
        m = jnp.where(row_ids < rows, matched, 0)
        acc_ref[...] += m.reshape(tile_rows // 8, 8, _LANES).sum(axis=0)

    @pl.when(i == n_inner - 1)
    def _finalize():
        out_ref[...] = acc_ref[...]


def accuracy(pred, gt, threshold=0.5):
    assert pred.shape == gt.shape, (
        f"2 shapes must be equal, found :{pred.shape} and {gt.shape}")
    numel = int(pred.size)
    threshold = float(threshold)

    flat_p = pred.reshape(-1)
    flat_g = gt.reshape(-1)

    rows = numel // _LANES
    row_mult = max(_sublane_multiple(pred.dtype), _sublane_multiple(gt.dtype))

    matched_total = jnp.float32(0.0)
    tail_start = 0

    if rows >= row_mult:
        target_bytes, n_outer_max, vmem_limit, use_core_parallel = _tpu_config()
        itemsize = max(jnp.dtype(pred.dtype).itemsize,
                       jnp.dtype(gt.dtype).itemsize)

        # Byte-budgeted, dtype-aware block height.
        budget_rows = _round_down(
            max(target_bytes // (_LANES * itemsize), row_mult), row_mult)
        tile_rows = max(row_mult, min(budget_rows, _round_down(rows, row_mult)))

        n_tiles = pl.cdiv(rows, tile_rows)
        n_full_tiles = rows // tile_rows
        n_outer = n_outer_max if n_tiles >= n_outer_max else 1
        n_inner = pl.cdiv(n_tiles, n_outer)

        main_elems = rows * _LANES
        # TODO(synk): when numel % 128 != 0 this prefix slice materializes a
        # copy of both inputs before the pallas_call (extra HBM traffic). A
        # fully copy-free path needs manual DMA from the flat HBM refs; for
        # 128-aligned sizes (the common case) the reshape below is free.
        p2 = (flat_p if main_elems == numel
              else flat_p[:main_elems]).reshape(rows, _LANES)
        g2 = (flat_g if main_elems == numel
              else flat_g[:main_elems]).reshape(rows, _LANES)

        if 0.0 < threshold < 1.0:
            mode, logit_thr = "logit", math.log(threshold / (1.0 - threshold))
        elif threshold >= 1.0:
            mode, logit_thr = "all_false", 0.0
        else:
            mode, logit_thr = "all_true", 0.0

        kernel = functools.partial(
            _accuracy_kernel, tile_rows=tile_rows, rows=rows, n_inner=n_inner,
            n_full_tiles=n_full_tiles, mode=mode, logit_thr=logit_thr)

        if n_outer * n_inner > n_tiles:
            # Uneven core split: clamp so the DMA window never starts fully out
            # of bounds; the in-kernel edge branch zeroes the duplicated tile.
            def in_map(p, i):
                return (jnp.minimum(p * n_inner + i, n_tiles - 1), 0)
        else:
            def in_map(p, i):
                return (p * n_inner + i, 0)

        if use_core_parallel and n_outer > 1:
            dim_sem = (pltpu.CORE_PARALLEL, pltpu.ARBITRARY)
        else:
            dim_sem = ("arbitrary", "arbitrary")

        block_bytes = tile_rows * _LANES * itemsize
        vmem_limit = int(max(vmem_limit, 4 * block_bytes + (8 << 20)))

        cost = pl.CostEstimate(
            flops=6 * numel,
            transcendentals=0,
            bytes_accessed=numel * (jnp.dtype(pred.dtype).itemsize
                                    + jnp.dtype(gt.dtype).itemsize))

        partials = pl.pallas_call(
            kernel,
            out_shape=jax.ShapeDtypeStruct((n_outer * 8, _LANES), jnp.int32),
            grid_spec=pltpu.PrefetchScalarGridSpec(
                num_scalar_prefetch=0,
                grid=(n_outer, n_inner),
                in_specs=[
                    pl.BlockSpec((tile_rows, _LANES), in_map),
                    pl.BlockSpec((tile_rows, _LANES), in_map),
                ],
                out_specs=pl.BlockSpec((8, _LANES), lambda p, i: (p, 0)),
                scratch_shapes=[pltpu.VMEM((8, _LANES), jnp.int32)],
            ),
            compiler_params=pltpu.CompilerParams(
                dimension_semantics=dim_sem,
                vmem_limit_bytes=vmem_limit),
            cost_estimate=cost,
        )(p2, g2)

        # Exact int32 partial counts; final (tiny) reduce + divide in JAX.
        if numel < 2 ** 31:
            matched_total = matched_total + jnp.sum(partials).astype(jnp.float32)
        else:
            matched_total = matched_total + jnp.sum(partials.astype(jnp.float32))
        tail_start = main_elems

    if tail_start < numel:
        # Leftover elements that don't fill whole 128-lane rows (< 16 KiB):
        # plain JAX, negligible cost, keeps the kernel path copy-free.
        tp = jax.nn.sigmoid(flat_p[tail_start:].astype(jnp.float32))
        tp = jnp.where(tp > threshold, jnp.float32(1.0), jnp.float32(0.0))
        tg = flat_g[tail_start:].astype(jnp.float32)
        matched_total = matched_total + jnp.sum((tp == tg).astype(jnp.float32))

    return matched_total / jnp.float32(numel)


def _accuracy_ref(pred, gt, threshold=0.5):
    p = jax.nn.sigmoid(pred.astype(jnp.float32))
    p = jnp.where(p > threshold, 1.0, 0.0)
    matched = (p == gt.astype(jnp.float32))
    return jnp.sum(matched.astype(jnp.float32)) / pred.size


if __name__ == "__main__":
    key = jax.random.PRNGKey(0)
    k1, k2, k3, k4 = jax.random.split(key, 4)

    # NCHW logits and binary ground truth (same shapes, per the module).
    shape = (2, 4, 16, 16)
    pred = jax.random.normal(k1, shape, dtype=jnp.float32)
    gt = (jax.random.uniform(k2, shape) > 0.5).astype(jnp.float32)

    acc = jax.block_until_ready(accuracy(pred, gt, threshold=0.5))
    ref = _accuracy_ref(pred, gt, threshold=0.5)
    assert abs(float(acc) - float(ref)) < 1e-6, (float(acc), float(ref))

    # Second shape: exercises the partial last tile (masked edge branch) and
    # the <128-element tail path.
    shape2 = (3, 5, 17, 19)
    pred2 = jax.random.normal(k3, shape2, dtype=jnp.float32)
    gt2 = (jax.random.uniform(k4, shape2) > 0.5).astype(jnp.float32)

    acc2 = jax.block_until_ready(accuracy(pred2, gt2, threshold=0.5))
    ref2 = _accuracy_ref(pred2, gt2, threshold=0.5)
    assert abs(float(acc2) - float(ref2)) < 1e-6, (float(acc2), float(ref2))

    print("KERNEL_OK")
</pallas_src>

<mosaic_0001>
module attributes {stable_mosaic.version = 11 : i64} {
  func.func @_accuracy_kernel(%arg0: i32, %arg1: i32, %arg2: memref<16x128xf32, #tpu.memory_space<vmem>>, %arg3: memref<16x128xf32, #tpu.memory_space<vmem>>, %arg4: memref<8x128xi32, #tpu.memory_space<vmem>>, %arg5: memref<8x128xi32, #tpu.memory_space<vmem>>) attributes {dimension_semantics = [#tpu.dimension_semantics<arbitrary>, #tpu.dimension_semantics<arbitrary>], iteration_bounds = array<i64: 1, 1>, scalar_prefetch = 0 : i64, scratch_operands = 1 : i64, tpu.core_type = #tpu.core_type<tc>, window_params = [{transform_indices = @transform_0, window_bounds = array<i64: 16, 128>}, {transform_indices = @transform_1, window_bounds = array<i64: 16, 128>}, {transform_indices = @transform_2, window_bounds = array<i64: 8, 128>}]} {
    %c0_i32 = arith.constant 0 : i32
    %0 = arith.cmpi eq, %arg1, %c0_i32 : i32
    %1 = arith.extui %0 : i1 to i32
    %c0_i32_0 = arith.constant 0 : i32
    %2 = arith.cmpi ne, %1, %c0_i32_0 : i32
    scf.if %2 {
      %c0_i32_10 = arith.constant 0 : i32
      %22 = vector.broadcast %c0_i32_10 : i32 to vector<8x128xi32>
      %c0_11 = arith.constant 0 : index
      %c0_12 = arith.constant 0 : index
      %23 = vector.load %arg5[%c0_11, %c0_12] : memref<8x128xi32, #tpu.memory_space<vmem>>, vector<8x128xi32>
      tpu.vector_store %arg5[%c0_11, %c0_12], %22 {strides = array<i32>} : memref<8x128xi32, #tpu.memory_space<vmem>>, vector<8x128xi32>,
    } else {
    }
    %c0 = arith.constant 0 : index
    %c0_1 = arith.constant 0 : index
    %3 = vector.load %arg2[%c0, %c0_1] : memref<16x128xf32, #tpu.memory_space<vmem>>, vector<16x128xf32>
    %cst = arith.constant 0.000000e+00 : f32
    %4 = vector.broadcast %cst : f32 to vector<16x128xf32>
    %5 = arith.cmpf ogt, %3, %4 : vector<16x128xf32>
    %c0_2 = arith.constant 0 : index
    %c0_3 = arith.constant 0 : index
    %6 = vector.load %arg3[%c0_2, %c0_3] : memref<16x128xf32, #tpu.memory_space<vmem>>, vector<16x128xf32>
    %7 = arith.extui %5 : vector<16x128xi1> to vector<16x128xi32>
    %8 = arith.sitofp %7 : vector<16x128xi32> to vector<16x128xf32>
    %9 = arith.cmpf oeq, %8, %6 : vector<16x128xf32>
    %10 = arith.extui %9 : vector<16x128xi1> to vector<16x128xi32>
    %c1_i32 = arith.constant 1 : i32
    %11 = arith.muli %arg0, %c1_i32 : i32
    %12 = arith.addi %11, %arg1 : i32
    %c1_i32_4 = arith.constant 1 : i32
    %13 = arith.cmpi slt, %12, %c1_i32_4 : i32
    %14 = arith.extui %13 : i1 to i32
    %c0_i32_5 = arith.constant 0 : i32
    %15 = arith.cmpi ne, %14, %c0_i32_5 : i32
    scf.if %15 {
      %c0_10 = arith.constant 0 : index
      %c0_11 = arith.constant 0 : index
      %22 = vector.load %arg5[%c0_10, %c0_11] : memref<8x128xi32, #tpu.memory_space<vmem>>, vector<8x128xi32>
      %23 = vector.shape_cast %10 : vector<16x128xi32> to vector<2x8x128xi32>
      %cst_12 = arith.constant dense<0> : vector<8x128xi32>
      %24 = vector.multi_reduction <add>, %23, %cst_12 [0] : vector<2x8x128xi32> to vector<8x128xi32>
      %25 = arith.addi %22, %24 : vector<8x128xi32>
      %c0_13 = arith.constant 0 : index
      %c0_14 = arith.constant 0 : index
      %26 = vector.load %arg5[%c0_13, %c0_14] : memref<8x128xi32, #tpu.memory_space<vmem>>, vector<8x128xi32>
      tpu.vector_store %arg5[%c0_13, %c0_14], %25 {strides = array<i32>} : memref<8x128xi32, #tpu.memory_space<vmem>>, vector<8x128xi32>,
    } else {
    }
    %c1_i32_6 = arith.constant 1 : i32
    %16 = arith.cmpi sge, %12, %c1_i32_6 : i32
    %17 = arith.extui %16 : i1 to i32
    %c0_i32_7 = arith.constant 0 : i32
    %18 = arith.cmpi ne, %17, %c0_i32_7 : i32
    scf.if %18 {
      %c16_i32 = arith.constant 16 : i32
      %22 = arith.muli %12, %c16_i32 : i32
      %23 = tpu.iota {dimensions = array<i32: 0>} : vector<16x128xi32>
      %24 = vector.broadcast %22 : i32 to vector<16x128xi32>
      %25 = arith.addi %24, %23 : vector<16x128xi32>
      %c16_i32_10 = arith.constant 16 : i32
      %26 = vector.broadcast %c16_i32_10 : i32 to vector<16x128xi32>
      %27 = arith.cmpi slt, %25, %26 : vector<16x128xi32>
      %c0_i32_11 = arith.constant 0 : i32
      %28 = vector.broadcast %c0_i32_11 : i32 to vector<16x128xi32>
      %29 = arith.select %27, %10, %28 : vector<16x128xi1>, vector<16x128xi32>
      %c0_12 = arith.constant 0 : index
      %c0_13 = arith.constant 0 : index
      %30 = vector.load %arg5[%c0_12, %c0_13] : memref<8x128xi32, #tpu.memory_space<vmem>>, vector<8x128xi32>
      %31 = vector.shape_cast %29 : vector<16x128xi32> to vector<2x8x128xi32>
      %cst_14 = arith.constant dense<0> : vector<8x128xi32>
      %32 = vector.multi_reduction <add>, %31, %cst_14 [0] : vector<2x8x128xi32> to vector<8x128xi32>
      %33 = arith.addi %30, %32 : vector<8x128xi32>
      %c0_15 = arith.constant 0 : index
      %c0_16 = arith.constant 0 : index
      %34 = vector.load %arg5[%c0_15, %c0_16] : memref<8x128xi32, #tpu.memory_space<vmem>>, vector<8x128xi32>
      tpu.vector_store %arg5[%c0_15, %c0_16], %33 {strides = array<i32>} : memref<8x128xi32, #tpu.memory_space<vmem>>, vector<8x128xi32>,
    } else {
    }
    %c0_i32_8 = arith.constant 0 : i32
    %19 = arith.cmpi eq, %arg1, %c0_i32_8 : i32
    %20 = arith.extui %19 : i1 to i32
    %c0_i32_9 = arith.constant 0 : i32
    %21 = arith.cmpi ne, %20, %c0_i32_9 : i32
    scf.if %21 {
      %c0_10 = arith.constant 0 : index
      %c0_11 = arith.constant 0 : index
      %22 = vector.load %arg5[%c0_10, %c0_11] : memref<8x128xi32, #tpu.memory_space<vmem>>, vector<8x128xi32>
      %c0_12 = arith.constant 0 : index
      %c0_13 = arith.constant 0 : index
      %23 = vector.load %arg4[%c0_12, %c0_13] : memref<8x128xi32, #tpu.memory_space<vmem>>, vector<8x128xi32>
      tpu.vector_store %arg4[%c0_12, %c0_13], %22 {strides = array<i32>} : memref<8x128xi32, #tpu.memory_space<vmem>>, vector<8x128xi32>,
    } else {
    }
    return
  }
  func.func @transform_0(%arg0: i32, %arg1: i32) -> (i32, i32) {
    %c1_i32 = arith.constant 1 : i32
    %0 = arith.muli %arg0, %c1_i32 : i32
    %1 = arith.addi %0, %arg1 : i32
    %c0_i32 = arith.constant 0 : i32
    %c0_i32_0 = arith.constant 0 : i32
    return %1, %c0_i32 : i32, i32
  }
  func.func @transform_1(%arg0: i32, %arg1: i32) -> (i32, i32) {
    %c1_i32 = arith.constant 1 : i32
    %0 = arith.muli %arg0, %c1_i32 : i32
    %1 = arith.addi %0, %arg1 : i32
    %c0_i32 = arith.constant 0 : i32
    %c0_i32_0 = arith.constant 0 : i32
    return %1, %c0_i32 : i32, i32
  }
  func.func @transform_2(%arg0: i32, %arg1: i32) -> (i32, i32) {
    %c0_i32 = arith.constant 0 : i32
    %c0_i32_0 = arith.constant 0 : i32
    return %arg0, %c0_i32 : i32, i32
  }
}

</mosaic_0001>

<llo_original>
// kernel: tpu_custom_call.1
$region0: #{tpu_custom_call.1}
  #allocation0 [shape = 'u32[]', space=smem, size = 0x4, offset = 0x4, fixed_abs, tag = 'smem constant byte address 0x4 - core index']
  #allocation1 [shape = 'u32[72,128]{1,0:T(1,128)}', space=vmem, size = 0x9000, scoped, tag = 'internal scratch']
  #allocation2 [shape = 's32[8,128]{1,0:T(8,128)}', space=vmem, size = 0x1000, scoped, tag = 'scratch operand']
  %s0 = inlined_call_operand.hbm [shape: f32[16,128], index: 0, kind: input, shape index: {}]
  %s1 = inlined_call_operand.hbm [shape: f32[16,128], index: 1, kind: input, shape index: {}]
  %s2 = inlined_call_operand.hbm [shape: s32[8,128], index: 2, kind: output, shape index: {}]
  %s3 = sld [smem:[#allocation0]]
  $region42: #{tpu_custom_call.1} parent=0
    _
  %s5 = ssub.s32 1, %s3
  %s6 = scalar_select 0, %s5, %s3
  $region1: #{tpu_custom_call.1} parent=0
    #allocation3 [shape = 'u8[8192]{0}', space=vmem, size = 0x2000, scoped, tag = 'input window, operand 0, single buffered']
    #allocation4 [shape = 's32[1]{0}', space=sflag, size = 0x4, scoped, tag = 'scoped memory for tpu_custom_call.1']
    #allocation5 [shape = 's32[1]{0}', space=sflag, size = 0x4, scoped, tag = 'scoped memory for tpu_custom_call.1']
    #allocation6 [shape = 'u8[8192]{0}', space=vmem, size = 0x2000, scoped, tag = 'input window, operand 1, single buffered']
    #allocation7 [shape = 's32[1]{0}', space=sflag, size = 0x4, scoped, tag = 'scoped memory for tpu_custom_call.1']
    #allocation8 [shape = 'u8[4096]{0}', space=vmem, size = 0x1000, scoped, tag = 'output window, operand 0, single buffered']
    %7 = vsyncpa [#allocation4], 0
    %8 = vsyncpa [#allocation7], 0
    %9 = vsyncpa [#allocation5], 0
    // Predicated region
    $region2: #{tpu_custom_call.1} parent=1 // pred_check
      _
    $region3: #{tpu_custom_call.1} parent=1 // pred_check_branch
      %11 = sbr.rel (0) target = $region5
    $region4: #{tpu_custom_call.1} parent=1 // pred_region
      %s12 = sadd.s32 0, 0
      %s13 = smul.u32 2, %s12
      %15 = vsyncadd [#allocation4], 0
      %s16 = smul.addr %s13, 8
      %s17 = scalar_lea.hbm %s0, %s16
      %s18 = sshll.u32 %s17, 4
      %s19 = int_to_ptr.hbm [resolvable:$true] %s18
      %s20 = sshll.u32 [#allocation3], 4
      %s21 = int_to_ptr.vmem [resolvable:$true] %s20
      %26 = dma.hbm_to_vmem [thread:$0]  %s19, 256, %s21, [#allocation4], 128, 128, 8
    $region5: #{tpu_custom_call.1} parent=1 // pred_fallthru
      _
    // Predicated region
    $region6: #{tpu_custom_call.1} parent=1 // pred_check
      _
    $region7: #{tpu_custom_call.1} parent=1 // pred_check_branch
      %28 = sbr.rel (0) target = $region9
    $region8: #{tpu_custom_call.1} parent=1 // pred_region
      %s29 = sadd.s32 0, 0
      %s30 = smul.u32 2, %s29
      %32 = vsyncadd [#allocation7], 0
      %s33 = smul.addr %s30, 8
      %s34 = scalar_lea.hbm %s1, %s33
      %s35 = sshll.u32 %s34, 4
      %s36 = int_to_ptr.hbm [resolvable:$true] %s35
      %s37 = sshll.u32 [#allocation6], 4
      %s38 = int_to_ptr.vmem [resolvable:$true] %s37
      %43 = dma.hbm_to_vmem [thread:$0]  %s36, 256, %s38, [#allocation7], 128, 128, 8
    $region9: #{tpu_custom_call.1} parent=1 // pred_fallthru
      _
    // Predicated region
    $region10: #{tpu_custom_call.1} parent=1 // pred_check
      _
    $region11: #{tpu_custom_call.1} parent=1 // pred_check_branch
      %45 = sbr.rel (0) target = $region13
    $region12: #{tpu_custom_call.1} parent=1 // pred_region
      %47 = dma.done [#allocation4], 256
    $region13: #{tpu_custom_call.1} parent=1 // pred_fallthru
      _
    // Predicated region
    $region14: #{tpu_custom_call.1} parent=1 // pred_check
      _
    $region15: #{tpu_custom_call.1} parent=1 // pred_check_branch
      %49 = sbr.rel (0) target = $region17
    $region16: #{tpu_custom_call.1} parent=1 // pred_region
      %51 = dma.done [#allocation7], 256
    $region17: #{tpu_custom_call.1} parent=1 // pred_fallthru
      _
    %s52 = sadd.s32 0, 0
    %s53 = smul.u32 2, %s52
    %s54 = sadd.s32 0, 0
    %s55 = smul.u32 2, %s54
    %p56 = scmp.eq.s32.totalorder 0, 0
    // Predicated region
    $region18: #{tpu_custom_call.1} parent=1 // pred_check
      %p57 = pneg %p56
    $region19: #{tpu_custom_call.1} parent=1 // pred_check_branch
      %59 = sbr.rel (%p57) target = $region21
    $region20: #{tpu_custom_call.1} parent=1 // pred_region
      %60 = vst [vmem:[#allocation2] sm:$0xff] 0
    $region21: #{tpu_custom_call.1} parent=1 // pred_fallthru
      _
    %v61 = vld [vmem:[#allocation3] sm:$0xff]
    %v62 = vld [vmem:[#allocation3 + $0x8] sm:$0xff]
    %vm63 = vcmp.gt.f32.partialorder %v61, 0.0
    %vm64 = vcmp.gt.f32.partialorder %v62, 0.0
    %v65 = vld [vmem:[#allocation6] sm:$0xff]
    %v66 = vld [vmem:[#allocation6 + $0x8] sm:$0xff]
    %v67 = vsel %vm63, 1, 0
    %v68 = vsel %vm64, 1, 0
    %v69 = vcvt.s32.f32 %v67
    %v70 = vcvt.s32.f32 %v68
    %vm71 = vcmp.eq.f32.partialorder %v69, %v65
    %vm72 = vcmp.eq.f32.partialorder %v70, %v66
    %v73 = vsel %vm71, 1, 0
    %v74 = vsel %vm72, 1, 0
    %s75 = sadd.s32 0, 0
    %p76 = scmp.lt.s32.totalorder %s75, 1
    // Predicated region
    $region22: #{tpu_custom_call.1} parent=1 // pred_check
      %p77 = pneg %p76
    $region23: #{tpu_custom_call.1} parent=1 // pred_check_branch
      %79 = sbr.rel (%p77) target = $region25
    $region24: #{tpu_custom_call.1} parent=1 // pred_region
      %v80 = vld [vmem:[#allocation2] sm:$0xff]
      %v81 = vadd.s32 %v73, %v74
      %v82 = vadd.s32 %v80, %v81
      %83 = vst [vmem:[#allocation2] sm:$0xff] %v82
    $region25: #{tpu_custom_call.1} parent=1 // pred_fallthru
      _
    %p84 = scmp.ge.s32.totalorder %s75, 1
    // Predicated region
    $region26: #{tpu_custom_call.1} parent=1 // pred_check
      %p85 = pneg %p84
    $region27: #{tpu_custom_call.1} parent=1 // pred_check_branch
      %87 = sbr.rel (%p85) target = $region29
    $region28: #{tpu_custom_call.1} parent=1 // pred_region
      %s88 = smul.u32 %s75, 16
      %v89 = vlaneseq
      %v90 = vshrl.u32 %v89, 7
      %v91 = vadd.s32 %v90, 8
      %v92 = vstv %s88
      %v93 = vadd.s32 %v92, %v90
      %v94 = vadd.s32 %v92, %v91
      %vm95 = vcmp.lt.s32.totalorder %v93, 16
      %vm96 = vcmp.lt.s32.totalorder %v94, 16
      %v97 = vsel %vm95, %v73, 0
      %v98 = vsel %vm96, %v74, 0
      %v99 = vld [vmem:[#allocation2] sm:$0xff]
      %v100 = vadd.s32 %v97, %v98
      %v101 = vadd.s32 %v99, %v100
      %102 = vst [vmem:[#allocation2] sm:$0xff] %v101
    $region29: #{tpu_custom_call.1} parent=1 // pred_fallthru
      _
    // Predicated region
    $region30: #{tpu_custom_call.1} parent=1 // pred_check
      %p103 = pneg %p56
    $region31: #{tpu_custom_call.1} parent=1 // pred_check_branch
      %105 = sbr.rel (%p103) target = $region33
    $region32: #{tpu_custom_call.1} parent=1 // pred_region
      %v106 = vld [vmem:[#allocation2] sm:$0xff]
      %107 = vst [vmem:[#allocation8] sm:$0xff] %v106
    $region33: #{tpu_custom_call.1} parent=1 // pred_fallthru
      _
    // Predicated region
    $region34: #{tpu_custom_call.1} parent=1 // pred_check
      _
    $region35: #{tpu_custom_call.1} parent=1 // pred_check_branch
      %109 = sbr.rel (0) target = $region37
    $region36: #{tpu_custom_call.1} parent=1 // pred_region
      %111 = vsyncadd [#allocation5], 0
      %s113 = sshll.u32 [#allocation8], 4
      %s114 = int_to_ptr.vmem [resolvable:$true] %s113
      %s115 = sshll.u32 %s2, 4
      %s116 = int_to_ptr.hbm [resolvable:$true] %s115
      %118 = dma.vmem_to_hbm [thread:$0]  %s114, 128, %s116, [#allocation5]
    $region37: #{tpu_custom_call.1} parent=1 // pred_fallthru
      _
    // Predicated region
    $region38: #{tpu_custom_call.1} parent=1 // pred_check
      _
    $region39: #{tpu_custom_call.1} parent=1 // pred_check_branch
      %120 = sbr.rel (0) target = $region41
    $region40: #{tpu_custom_call.1} parent=1 // pred_region
      %122 = dma.done [#allocation5], 128
    $region41: #{tpu_custom_call.1} parent=1 // pred_fallthru
      _
    %123 = vsyncpa [#allocation4], 1
    %124 = vsyncpa [#allocation7], 1
    %125 = vsyncpa [#allocation5], 1

</llo_original>
